<compile_context>
chip_gen: v7x
topology: tpu7x:2x2x1
jax: 0.10.0
libtpu: 0.0.40
codegen_flags: <defaults>
</compile_context>

<pallas_src>
import functools

import jax
import jax.numpy as jnp
from jax.experimental import pallas as pl
from jax.experimental.pallas import tpu as pltpu


def _round_up(n: int, m: int) -> int:
    return ((n + m - 1) // m) * m


# Below this many "gather cells" (B * R) the pallas_call launch + grid-step overhead
# dominates; plain XLA gather is as fast or faster, so fall back unless forced.
_PALLAS_MIN_WORK = 1 << 16

# One-hot path limits: above these, the O(B*R) VALU/MXU cost and the VMEM residency of
# the (double-buffered) table make the DMA row-gather the better choice.
_ONEHOT_MAX_TABLE_BYTES = 4 << 20     # single copy of fused table (<= ~8 MiB resident)
_ONEHOT_MAX_ROWS = 8192

# Rows gathered per grid step in the DMA path.
_DMA_TILE = 128

# Working-set target for the one-hot path (safe on v7x's 64 MiB per-TC VMEM) and the
# explicit scoped-VMEM ceiling we request from the compiler.
_VMEM_WORKING_SET_BUDGET = 48 << 20
_VMEM_LIMIT_CAP = 64 << 20
_VMEM_LIMIT_FLOOR = 8 << 20


# ----------------------------------------------------------------------------------
# Kernel 1: one-hot MXU gather (small / medium tables, table resident in VMEM)
# ----------------------------------------------------------------------------------
def _onehot_gather_kernel(x_ref, table_ref, out_ref):
    """x_ref: (tb, 1) i32, table_ref: (R, Wpad) f32, out_ref: (tb, Wpad) f32."""
    tb = out_ref.shape[0]
    rows = table_ref.shape[0]
    idx = x_ref[...]                                               # (tb, 1) int32
    # NOTE: iota+compare is rebuilt per grid step.  Hoisting it into a VMEM scratch
    # under pl.when(program_id==0) is unsafe with "parallel" dimension_semantics
    # (only one core would run step 0), and the compare/cast is unavoidable anyway.
    row_ids = jax.lax.broadcasted_iota(jnp.int32, (tb, rows), 1)   # (tb, R)
    onehot = (row_ids == idx).astype(jnp.float32)                  # (tb, R) f32
    # precision=HIGHEST -> full 3-way bf16 split so the one-hot matmul reproduces the
    # f32 table rows faithfully (a true gather, not an approximate one).
    out_ref[...] = jnp.dot(onehot, table_ref[...],
                           preferred_element_type=jnp.float32,
                           precision=jax.lax.Precision.HIGHEST)


def _choose_onehot_tb(B: int, R: int, Wpad: int) -> int:
    """Pick the largest 128-multiple batch tile whose working set fits the budget."""
    R128 = _round_up(R, 128)
    table_bytes = R * Wpad * 4
    # table is double-buffered by the default pipeline (constant index_map).
    # TODO(synk): single-buffer the constant table (pipeline_mode=pl.Buffered(1)) once
    # confirmed supported; the DMA path already covers tables too big for 2x residency.
    budget = _VMEM_WORKING_SET_BUDGET - 2 * table_bytes
    per_row = 4 * (2 * Wpad        # double-buffered output tile
                   + 2 * 128       # double-buffered (tb,1)->(tb,128) index tile
                   + 4 * R128)     # one-hot / iota / compare temporaries (conservative)
    tb = budget // per_row if budget > 0 else 128
    tb = int(max(128, min(512, (tb // 128) * 128)))
    tb = min(tb, _round_up(B, 128))
    return tb


def _onehot_gather(x, fused_table, B: int, R: int, Wpad: int):
    tb = _choose_onehot_tb(B, R, Wpad)
    Bp = _round_up(B, tb)
    x_col = jnp.pad(x, (0, Bp - B))[:, None]                       # (Bp, 1) int32

    R128 = _round_up(R, 128)
    table_bytes = R * Wpad * 4
    need = (2 * table_bytes + 2 * tb * 128 * 4 + 2 * tb * Wpad * 4
            + 4 * tb * R128 * 4)
    vmem_limit = int(min(max(need * 3 // 2, _VMEM_LIMIT_FLOOR), _VMEM_LIMIT_CAP))

    fused_out = pl.pallas_call(
        _onehot_gather_kernel,
        out_shape=jax.ShapeDtypeStruct((Bp, Wpad), jnp.float32),
        grid_spec=pltpu.PrefetchScalarGridSpec(
            num_scalar_prefetch=0,
            grid=(Bp // tb,),
            in_specs=[
                pl.BlockSpec((tb, 1), lambda i: (i, 0)),           # indices
                pl.BlockSpec((R, Wpad), lambda i: (0, 0)),         # fused table (full)
            ],
            out_specs=pl.BlockSpec((tb, Wpad), lambda i: (i, 0)),  # lane-dense output
        ),
        compiler_params=pltpu.CompilerParams(
            dimension_semantics=("parallel",),
            vmem_limit_bytes=vmem_limit),
        cost_estimate=pl.CostEstimate(
            flops=2 * Bp * R * Wpad,
            transcendentals=0,
            bytes_accessed=table_bytes + Bp * 4 + Bp * Wpad * 4),
    )(x_col, fused_table)
    return fused_out[:B]


# ----------------------------------------------------------------------------------
# Kernel 2: manual DMA row gather (large tables; table stays in HBM)
# ----------------------------------------------------------------------------------
def _dma_gather_kernel(x_ref, table_ref, out_ref, row_buf, sem):
    """x_ref: SMEM (Bp,) i32 (scalar-prefetched); table_ref: HBM (R, Wpad) f32;
    out_ref: VMEM (tile, Wpad) f32; row_buf: VMEM (tile, Wpad) f32; sem: DMA sem (1,)."""
    tile = out_ref.shape[0]
    base = pl.program_id(0) * tile

    # Issue one row DMA per batch element of this tile, all on a single semaphore.
    def _start(r, carry):
        idx = x_ref[base + r]
        pltpu.make_async_copy(table_ref.at[pl.ds(idx, 1), :],
                              row_buf.at[pl.ds(r, 1), :],
                              sem.at[0]).start()
        return carry

    jax.lax.fori_loop(0, tile, _start, 0)

    # Drain: cumulative byte accounting on the shared semaphore guarantees all row
    # copies have landed once the last wait returns (source slice is a stand-in).
    def _wait(r, carry):
        pltpu.make_async_copy(table_ref.at[pl.ds(0, 1), :],
                              row_buf.at[pl.ds(r, 1), :],
                              sem.at[0]).wait()
        return carry

    jax.lax.fori_loop(0, tile, _wait, 0)

    out_ref[...] = row_buf[...]


def _dma_gather(x, fused_table, B: int, R: int, Wpad: int):
    tile = _DMA_TILE
    Bp = _round_up(B, tile)
    x_pad = jnp.pad(x, (0, Bp - B)).astype(jnp.int32)              # (Bp,) int32

    need = 4 * tile * Wpad * 4                                     # row_buf + 2x out + slack
    vmem_limit = int(min(max(need * 2, _VMEM_LIMIT_FLOOR), _VMEM_LIMIT_CAP))

    out = pl.pallas_call(
        _dma_gather_kernel,
        out_shape=jax.ShapeDtypeStruct((Bp, Wpad), jnp.float32),
        grid_spec=pltpu.PrefetchScalarGridSpec(
            num_scalar_prefetch=1,                                 # x -> SMEM
            grid=(Bp // tile,),
            in_specs=[pl.BlockSpec(memory_space=pl.ANY)],          # table stays in HBM
            out_specs=pl.BlockSpec((tile, Wpad), lambda i, x_s: (i, 0)),
            scratch_shapes=[pltpu.VMEM((tile, Wpad), jnp.float32),
                            pltpu.SemaphoreType.DMA((1,))],
        ),
        compiler_params=pltpu.CompilerParams(
            dimension_semantics=("arbitrary",),
            vmem_limit_bytes=vmem_limit),
        cost_estimate=pl.CostEstimate(
            flops=0,
            transcendentals=0,
            bytes_accessed=2 * Bp * Wpad * 4 + Bp * 4),
    )(x_pad, fused_table)
    return out[:B]


# ----------------------------------------------------------------------------------
# Wrapper (forward-pass semantics of upgo_model)
# ----------------------------------------------------------------------------------
@functools.partial(jax.jit, static_argnames=("impl",))
def upgo_compute_actor_critic(x, ac_table, q_table, *, impl="auto"):
    """impl: "auto" | "xla" | "onehot" | "dma"."""
    assert impl in ("auto", "xla", "onehot", "dma")
    B = x.shape[0]
    R, A = ac_table.shape
    assert q_table.shape == (R, A)

    # Bounds safety: no runtime OOB check on in-kernel indexing / one-hot.
    x = jnp.clip(x.astype(jnp.int32), 0, R - 1)

    # Size gate: tiny tables / batches are overhead-dominated in a custom call.
    if impl == "xla" or (impl == "auto" and B * R < _PALLAS_MIN_WORK):
        q_value = q_table[x]
        return {"logit": ac_table[x], "q_value": q_value,
                "value": q_value.max(axis=-1)}

    # Fuse the two tables and pad the action axis to a multiple of 128 lanes so the
    # kernel's output block is lane-dense (unmasked vst) and a full MXU N tile.
    Wpad = _round_up(2 * A, 128)
    fused = jnp.concatenate([ac_table, q_table], axis=-1).astype(jnp.float32)
    if Wpad != 2 * A:
        fused = jnp.pad(fused, ((0, 0), (0, Wpad - 2 * A)))

    table_bytes = R * Wpad * 4
    use_dma = (impl == "dma") or (
        impl == "auto" and (table_bytes > _ONEHOT_MAX_TABLE_BYTES or R > _ONEHOT_MAX_ROWS))
    if impl == "onehot":
        use_dma = False

    if use_dma:
        fused_out = _dma_gather(x, fused, B, R, Wpad)
    else:
        fused_out = _onehot_gather(x, fused, B, R, Wpad)

    logit = fused_out[:, :A]
    q_value = fused_out[:, A:2 * A]          # padded zero columns excluded before max
    value = q_value.max(axis=-1)
    return {"logit": logit, "q_value": q_value, "value": value}


def upgo_compute_actor(x, ac_table, q_table, *, impl="auto"):
    out = upgo_compute_actor_critic(x, ac_table, q_table, impl=impl)
    return {"logit": out["logit"]}


def upgo_compute_critic(x, ac_table, q_table, *, impl="auto"):
    out = upgo_compute_actor_critic(x, ac_table, q_table, impl=impl)
    return {"value": out["value"]}


def upgo_forward(x, ac_table, q_table, mode, *, impl="auto"):
    modes = {
        "compute_actor": upgo_compute_actor,
        "compute_critic": upgo_compute_critic,
        "compute_actor_critic": upgo_compute_actor_critic,
    }
    assert mode in modes, f"not support forward mode: {mode}/{list(modes)}"
    return modes[mode](x, ac_table, q_table, impl=impl)


if __name__ == "__main__":
    # Small shapes consistent with the module: obs_shape=4 -> 60 table rows,
    # action_shape=8, batch=8.
    obs_shape = 4
    action_shape = 8
    batch = 8
    rows = 15 * obs_shape

    key = jax.random.PRNGKey(0)
    k_ac, k_q, k_x = jax.random.split(key, 3)
    # torch init is zeros; use deterministic random values so the gather is nontrivial.
    ac_table = jax.random.normal(k_ac, (rows, action_shape), dtype=jnp.float32)
    q_table = jax.random.normal(k_q, (rows, action_shape), dtype=jnp.float32)
    x = jax.random.randint(k_x, (batch,), 0, rows, dtype=jnp.int32)

    # Pure-JAX reference (same semantics as the torch gather + max).
    ref_logit = ac_table[x]
    ref_q = q_table[x]
    ref_value = ref_q.max(axis=-1)

    # 1) Forced one-hot MXU path.
    out = upgo_forward(x, ac_table, q_table, mode="compute_actor_critic", impl="onehot")
    jax.block_until_ready(out)
    assert out["logit"].shape == (batch, action_shape)
    assert out["q_value"].shape == (batch, action_shape)
    assert out["value"].shape == (batch,)
    assert jnp.allclose(out["logit"], ref_logit), "onehot logit mismatch"
    assert jnp.allclose(out["q_value"], ref_q), "onehot q_value mismatch"
    assert jnp.allclose(out["value"], ref_value), "onehot value mismatch"

    # 2) Forced DMA row-gather path (large-table fallback), exercised at small shapes.
    out_dma = upgo_forward(x, ac_table, q_table, mode="compute_actor_critic", impl="dma")
    jax.block_until_ready(out_dma)
    assert jnp.allclose(out_dma["logit"], ref_logit), "dma logit mismatch"
    assert jnp.allclose(out_dma["q_value"], ref_q), "dma q_value mismatch"
    assert jnp.allclose(out_dma["value"], ref_value), "dma value mismatch"

    # 3) Auto mode (plain-XLA fallback at this tiny size) must agree too.
    out_auto = upgo_forward(x, ac_table, q_table, mode="compute_actor_critic")
    jax.block_until_ready(out_auto)
    assert jnp.allclose(out_auto["logit"], ref_logit)
    assert jnp.allclose(out_auto["value"], ref_value)

    # 4) Other forward modes.
    a = upgo_forward(x, ac_table, q_table, mode="compute_actor", impl="onehot")
    c = upgo_forward(x, ac_table, q_table, mode="compute_critic", impl="dma")
    jax.block_until_ready((a, c))
    assert jnp.allclose(a["logit"], ref_logit)
    assert jnp.allclose(c["value"], ref_value)

    print("KERNEL_OK")
</pallas_src>

<mosaic_0001>
module attributes {stable_mosaic.version = 11 : i64} {
  func.func @_onehot_gather_kernel(%arg0: i32, %arg1: memref<128x1xi32, #tpu.memory_space<vmem>>, %arg2: memref<60x128xf32, #tpu.memory_space<vmem>>, %arg3: memref<128x128xf32, #tpu.memory_space<vmem>>) attributes {dimension_semantics = [#tpu.dimension_semantics<parallel>], iteration_bounds = array<i64: 1>, scalar_prefetch = 0 : i64, scratch_operands = 0 : i64, tpu.core_type = #tpu.core_type<tc>, window_params = [{transform_indices = @transform_0, window_bounds = array<i64: 128, 1>}, {pipeline_mode = #tpu.pipeline_mode<synchronous>, transform_indices = @transform_1, window_bounds = array<i64: 60, 128>}, {transform_indices = @transform_2, window_bounds = array<i64: 128, 128>}]} {
    %c0 = arith.constant 0 : index
    %c0_0 = arith.constant 0 : index
    %0 = vector.load %arg1[%c0, %c0_0] : memref<128x1xi32, #tpu.memory_space<vmem>>, vector<128x1xi32>
    %1 = tpu.iota {dimensions = array<i32: 1>} : vector<128x60xi32>
    %2 = vector.broadcast %0 : vector<128x1xi32> to vector<128x60xi32>
    %3 = arith.cmpi eq, %1, %2 : vector<128x60xi32>
    %4 = arith.extui %3 : vector<128x60xi1> to vector<128x60xi32>
    %5 = arith.sitofp %4 : vector<128x60xi32> to vector<128x60xf32>
    %c0_1 = arith.constant 0 : index
    %c0_2 = arith.constant 0 : index
    %6 = vector.load %arg2[%c0_1, %c0_2] : memref<60x128xf32, #tpu.memory_space<vmem>>, vector<60x128xf32>
    %cst = arith.constant dense<0.000000e+00> : vector<128x128xf32>
    %7 = tpu.matmul %5, %6, %cst {dimension_numbers = #tpu.dot_dimension_numbers<[1], [0], [0], [1], [0, 0, 1, 1], [], []>, precision = #tpu.contract_precision<fp32>} : vector<128x60xf32>, vector<60x128xf32>, vector<128x128xf32> -> vector<128x128xf32>
    %c0_3 = arith.constant 0 : index
    %c0_4 = arith.constant 0 : index
    %8 = vector.load %arg3[%c0_3, %c0_4] : memref<128x128xf32, #tpu.memory_space<vmem>>, vector<128x128xf32>
    tpu.vector_store %arg3[%c0_3, %c0_4], %7 {strides = array<i32>} : memref<128x128xf32, #tpu.memory_space<vmem>>, vector<128x128xf32>,
    return
  }
  func.func @transform_0(%arg0: i32) -> (i32, i32) {
    %c0_i32 = arith.constant 0 : i32
    %c0_i32_0 = arith.constant 0 : i32
    return %arg0, %c0_i32 : i32, i32
  }
  func.func @transform_1(%arg0: i32) -> (i32, i32) {
    %c0_i32 = arith.constant 0 : i32
    %c0_i32_0 = arith.constant 0 : i32
    %c0_i32_1 = arith.constant 0 : i32
    return %c0_i32, %c0_i32_0 : i32, i32
  }
  func.func @transform_2(%arg0: i32) -> (i32, i32) {
    %c0_i32 = arith.constant 0 : i32
    %c0_i32_0 = arith.constant 0 : i32
    return %arg0, %c0_i32 : i32, i32
  }
}

</mosaic_0001>

<llo_original>
// kernel: upgo_compute_actor_critic.1
$region0: #{upgo_compute_actor_critic.1}
  #allocation0 [shape = 'u32[]', space=smem, size = 0x4, offset = 0x4, fixed_abs, tag = 'smem constant byte address 0x4 - core index']
  #allocation1 [shape = 'u32[144,128]{1,0:T(1,128)}', space=vmem, size = 0x12000, scoped, tag = 'internal scratch']
  %s0 = inlined_call_operand.vmem [shape: s32[128,1], index: 0, kind: input, shape index: {}]
  %s1 = inlined_call_operand.vmem [shape: f32[60,128], index: 1, kind: input, shape index: {}]
  %s2 = inlined_call_operand.vmem [shape: f32[128,128], index: 2, kind: output, shape index: {}]
  %s3 = sld [smem:[#allocation0]]
  $region18: #{upgo_compute_actor_critic.1} parent=0
    _
  %s5 = ssub.s32 1, %s3
  %s6 = scalar_select 0, %s5, %s3
  // Predicated region
  $region2: #{upgo_compute_actor_critic.1} parent=0 // pred_check
    _
  $region3: #{upgo_compute_actor_critic.1} parent=0 // pred_check_branch
    %8 = sbr.rel (0) target = $region5
  $region4: #{upgo_compute_actor_critic.1} parent=0 // pred_region
    _
  $region5: #{upgo_compute_actor_critic.1} parent=0 // pred_fallthru
    _
  // Predicated region
  $region6: #{upgo_compute_actor_critic.1} parent=0 // pred_check
    _
  $region7: #{upgo_compute_actor_critic.1} parent=0 // pred_check_branch
    %10 = sbr.rel (0) target = $region9
  $region8: #{upgo_compute_actor_critic.1} parent=0 // pred_region
    _
  $region9: #{upgo_compute_actor_critic.1} parent=0 // pred_fallthru
    _
  %v11 = vld [vmem:[%s0] sm:$0xff]
  %v12 = vld [vmem:[%s0 + $0x8] sm:$0xff]
  %v13 = vld [vmem:[%s0 + $0x10] sm:$0xff]
  %v14 = vld [vmem:[%s0 + $0x18] sm:$0xff]
  %v15 = vld [vmem:[%s0 + $0x20] sm:$0xff]
  %v16 = vld [vmem:[%s0 + $0x28] sm:$0xff]
  %v17 = vld [vmem:[%s0 + $0x30] sm:$0xff]
  %v18 = vld [vmem:[%s0 + $0x38] sm:$0xff]
  %v19 = vld [vmem:[%s0 + $0x40] sm:$0xff]
  %v20 = vld [vmem:[%s0 + $0x48] sm:$0xff]
  %v21 = vld [vmem:[%s0 + $0x50] sm:$0xff]
  %v22 = vld [vmem:[%s0 + $0x58] sm:$0xff]
  %v23 = vld [vmem:[%s0 + $0x60] sm:$0xff]
  %v24 = vld [vmem:[%s0 + $0x68] sm:$0xff]
  %v25 = vld [vmem:[%s0 + $0x70] sm:$0xff]
  %v26 = vld [vmem:[%s0 + $0x78] sm:$0xff]
  %v27 = vlaneseq
  %v28 = vand.u32 %v27, 127
  %29 = vset.pattern.permute.xlu0 0
  %30 = vperm.xlu0 %29, %v11
  %v31 = vpop.permute.xlu0 %30
  %32 = vset.pattern.permute.xlu0 0
  %33 = vperm.xlu0 %32, %v12
  %v34 = vpop.permute.xlu0 %33
  %35 = vset.pattern.permute.xlu0 0
  %36 = vperm.xlu0 %35, %v13
  %v37 = vpop.permute.xlu0 %36
  %38 = vset.pattern.permute.xlu0 0
  %39 = vperm.xlu0 %38, %v14
  %v40 = vpop.permute.xlu0 %39
  %41 = vset.pattern.permute.xlu0 0
  %42 = vperm.xlu0 %41, %v15
  %v43 = vpop.permute.xlu0 %42
  %44 = vset.pattern.permute.xlu0 0
  %45 = vperm.xlu0 %44, %v16
  %v46 = vpop.permute.xlu0 %45
  %47 = vset.pattern.permute.xlu0 0
  %48 = vperm.xlu0 %47, %v17
  %v49 = vpop.permute.xlu0 %48
  %50 = vset.pattern.permute.xlu0 0
  %51 = vperm.xlu0 %50, %v18
  %v52 = vpop.permute.xlu0 %51
  %53 = vset.pattern.permute.xlu0 0
  %54 = vperm.xlu0 %53, %v19
  %v55 = vpop.permute.xlu0 %54
  %56 = vset.pattern.permute.xlu0 0
  %57 = vperm.xlu0 %56, %v20
  %v58 = vpop.permute.xlu0 %57
  %59 = vset.pattern.permute.xlu0 0
  %60 = vperm.xlu0 %59, %v21
  %v61 = vpop.permute.xlu0 %60
  %62 = vset.pattern.permute.xlu0 0
  %63 = vperm.xlu0 %62, %v22
  %v64 = vpop.permute.xlu0 %63
  %65 = vset.pattern.permute.xlu0 0
  %66 = vperm.xlu0 %65, %v23
  %v67 = vpop.permute.xlu0 %66
  %68 = vset.pattern.permute.xlu0 0
  %69 = vperm.xlu0 %68, %v24
  %v70 = vpop.permute.xlu0 %69
  %71 = vset.pattern.permute.xlu0 0
  %72 = vperm.xlu0 %71, %v25
  %v73 = vpop.permute.xlu0 %72
  %74 = vset.pattern.permute.xlu0 0
  %75 = vperm.xlu0 %74, %v26
  %v76 = vpop.permute.xlu0 %75
  %vm77 = vcmp.eq.s32.totalorder %v28, %v31
  %vm78 = vcmp.eq.s32.totalorder %v28, %v34
  %vm79 = vcmp.eq.s32.totalorder %v28, %v37
  %vm80 = vcmp.eq.s32.totalorder %v28, %v40
  %vm81 = vcmp.eq.s32.totalorder %v28, %v43
  %vm82 = vcmp.eq.s32.totalorder %v28, %v46
  %vm83 = vcmp.eq.s32.totalorder %v28, %v49
  %vm84 = vcmp.eq.s32.totalorder %v28, %v52
  %vm85 = vcmp.eq.s32.totalorder %v28, %v55
  %vm86 = vcmp.eq.s32.totalorder %v28, %v58
  %vm87 = vcmp.eq.s32.totalorder %v28, %v61
  %vm88 = vcmp.eq.s32.totalorder %v28, %v64
  %vm89 = vcmp.eq.s32.totalorder %v28, %v67
  %vm90 = vcmp.eq.s32.totalorder %v28, %v70
  %vm91 = vcmp.eq.s32.totalorder %v28, %v73
  %vm92 = vcmp.eq.s32.totalorder %v28, %v76
  %v93 = vsel %vm77, 1, 0
  %v94 = vsel %vm78, 1, 0
  %v95 = vsel %vm79, 1, 0
  %v96 = vsel %vm80, 1, 0
  %v97 = vsel %vm81, 1, 0
  %v98 = vsel %vm82, 1, 0
  %v99 = vsel %vm83, 1, 0
  %v100 = vsel %vm84, 1, 0
  %v101 = vsel %vm85, 1, 0
  %v102 = vsel %vm86, 1, 0
  %v103 = vsel %vm87, 1, 0
  %v104 = vsel %vm88, 1, 0
  %v105 = vsel %vm89, 1, 0
  %v106 = vsel %vm90, 1, 0
  %v107 = vsel %vm91, 1, 0
  %v108 = vsel %vm92, 1, 0
  %v109 = vcvt.s32.f32 %v93
  %v110 = vcvt.s32.f32 %v94
  %v111 = vcvt.s32.f32 %v95
  %v112 = vcvt.s32.f32 %v96
  %v113 = vcvt.s32.f32 %v97
  %v114 = vcvt.s32.f32 %v98
  %v115 = vcvt.s32.f32 %v99
  %v116 = vcvt.s32.f32 %v100
  %v117 = vcvt.s32.f32 %v101
  %v118 = vcvt.s32.f32 %v102
  %v119 = vcvt.s32.f32 %v103
  %v120 = vcvt.s32.f32 %v104
  %v121 = vcvt.s32.f32 %v105
  %v122 = vcvt.s32.f32 %v106
  %v123 = vcvt.s32.f32 %v107
  %v124 = vcvt.s32.f32 %v108
  %v125 = vld [vmem:[%s1] sm:$0xff]
  %v126 = vld [vmem:[%s1 + $0x8] sm:$0xff]
  %v127 = vld [vmem:[%s1 + $0x10] sm:$0xff]
  %v128 = vld [vmem:[%s1 + $0x18] sm:$0xff]
  %v129 = vld [vmem:[%s1 + $0x20] sm:$0xff]
  %v130 = vld [vmem:[%s1 + $0x28] sm:$0xff]
  %v131 = vld [vmem:[%s1 + $0x30] sm:$0xff]
  %v132 = vld [vmem:[%s1 + $0x38] sm:$0xf]
  %vm133 = vcmask 490496
  %v135 = vsel %vm133, %v109, 0
  %v138 = vsel %vm133, %v110, 0
  %v141 = vsel %vm133, %v111, 0
  %v144 = vsel %vm133, %v112, 0
  %v147 = vsel %vm133, %v113, 0
  %v150 = vsel %vm133, %v114, 0
  %v153 = vsel %vm133, %v115, 0
  %v156 = vsel %vm133, %v116, 0
  %v159 = vsel %vm133, %v117, 0
  %v162 = vsel %vm133, %v118, 0
  %v165 = vsel %vm133, %v119, 0
  %v168 = vsel %vm133, %v120, 0
  %v171 = vsel %vm133, %v121, 0
  %v174 = vsel %vm133, %v122, 0
  %v177 = vsel %vm133, %v123, 0
  %v180 = vsel %vm133, %v124, 0
  %vm182 = vcmask 1043456
  %v184 = vsel %vm182, %v132, 0
  %186 = vmatprep.subr.mxu0 0.0
  %v187 = vand.u32 %v125, 4294901760
  %188 = vmatpush1.msra.mxu0 %v187
  %189 = vmatprep.subr.mxu0 0.0
  %v190 = vand.u32 %v126, 4294901760
  %191 = vmatpush1.msra.mxu0 %v190
  %192 = vmatprep.subr.mxu0 0.0
  %v193 = vand.u32 %v127, 4294901760
  %194 = vmatpush1.msra.mxu0 %v193
  %195 = vmatprep.subr.mxu0 0.0
  %v196 = vand.u32 %v128, 4294901760
  %197 = vmatpush1.msra.mxu0 %v196
  %198 = vmatprep.subr.mxu0 0.0
  %v199 = vand.u32 %v129, 4294901760
  %200 = vmatpush1.msra.mxu0 %v199
  %201 = vmatprep.subr.mxu0 0.0
  %v202 = vand.u32 %v130, 4294901760
  %203 = vmatpush1.msra.mxu0 %v202
  %204 = vmatprep.subr.mxu0 0.0
  %v205 = vand.u32 %v131, 4294901760
  %206 = vmatpush1.msra.mxu0 %v205
  %207 = vmatprep.subr.mxu0 0.0
  %v208 = vand.u32 %v184, 4294901760
  %209 = vmatpush1.msra.mxu0 %v208
  %210 = vmatprep.subr.mxu0 0.0
  %211 = vmatpush1.msra.mxu0 0.0
  %212 = vmatprep.subr.mxu0 0.0
  %213 = vmatpush1.msra.mxu0 0.0
  %214 = vmatprep.subr.mxu0 0.0
  %215 = vmatpush1.msra.mxu0 0.0
  %216 = vmatprep.subr.mxu0 0.0
  %217 = vmatpush1.msra.mxu0 0.0
  %218 = vmatprep.subr.mxu0 0.0
  %219 = vmatpush1.msra.mxu0 0.0
  %220 = vmatprep.subr.mxu0 0.0
  %221 = vmatpush1.msra.mxu0 0.0
  %222 = vmatprep.subr.mxu0 0.0
  %223 = vmatpush1.msra.mxu0 0.0
  %224 = vmatprep.subr.mxu0 0.0
  %225 = vmatpush1.msra.mxu0 0.0
  %226 = vmatprep.subr.mxu0 0.0
  %227 = vmatpush1.msra.mxu0 0.0
  %228 = vmatprep.subr.mxu0 0.0
  %229 = vmatpush1.msra.mxu0 0.0
  %230 = vmatprep.subr.mxu0 0.0
  %231 = vmatpush1.msra.mxu0 0.0
  %232 = vmatprep.subr.mxu0 0.0
  %233 = vmatpush1.msra.mxu0 0.0
  %234 = vmatprep.subr.mxu0 0.0
  %235 = vmatpush1.msra.mxu0 0.0
  %236 = vmatprep.subr.mxu0 0.0
  %237 = vmatpush1.msra.mxu0 0.0
  %238 = vmatprep.subr.mxu0 0.0
  %239 = vmatpush1.msra.mxu0 0.0
  %240 = vmatprep.subr.mxu0 0.0
  %241 = vmatpush1.msra.mxu0 0.0
  %242 = vmatprep.subr.mxu0 0.0
  %243 = vmatpush1.msra.mxu0 0.0
  %244 = vmatprep.subr.mxu0 0.0
  %245 = vmatpush1.msra.mxu0 0.0
  %246 = vmatprep.subr.mxu0 0.0
  %247 = vmatpush1.msra.mxu0 0.0
  %248 = vmatprep.subr.mxu0 0.0
  %249 = vmatpush1.msra.mxu0 0.0
  %250 = vmatprep.subr.mxu0 0.0
  %251 = vmatpush1.msra.mxu0 0.0
  %252 = vmatprep.subr.mxu0 0.0
  %253 = vmatpush1.msra.mxu0 0.0
  %254 = vmatprep.subr.mxu0 0.0
  %255 = vmatpush1.msra.mxu0 0.0
  %256 = vmatprep.subr.mxu0 0.0
  %257 = vmatpush1.msra.mxu0 0.0
  %258 = vmatprep.mubr.f32.mxu0 0.0
  %v259 = vand.u32 %v135, 4294901760
  %v260 = vsub.f32 %v135, %v259
  %v261 = vand.u32 %v260, 4294901760
  %v262 = vsub.f32 %v260, %v261
  %v263 = vand.u32 %v262, 4294901760
  %264 = vmatmul.mubr.f32.gmra.mrb[0].mxu0 %v263
  %v265 = vpop.f32.mrb[0].mxu0
  %v266 = vadd.f32 0.0, %v265
  %v267 = vpop.f32.mrb[0].mxu0
  %268 = vmatprep.mubr.f32.mxu0 0.0
  %v269 = vand.u32 %v138, 4294901760
  %v270 = vsub.f32 %v138, %v269
  %v271 = vand.u32 %v270, 4294901760
  %v272 = vsub.f32 %v270, %v271
  %v273 = vand.u32 %v272, 4294901760
  %274 = vmatmul.mubr.f32.gmra.mrb[0].mxu0 %v273
  %v275 = vpop.f32.mrb[0].mxu0
  %v276 = vadd.f32 0.0, %v275
  %v277 = vpop.f32.mrb[0].mxu0
  %278 = vmatprep.mubr.f32.mxu0 0.0
  %v279 = vand.u32 %v141, 4294901760
  %v280 = vsub.f32 %v141, %v279
  %v281 = vand.u32 %v280, 4294901760
  %v282 = vsub.f32 %v280, %v281
  %v283 = vand.u32 %v282, 4294901760
  %284 = vmatmul.mubr.f32.gmra.mrb[0].mxu0 %v283
  %v285 = vpop.f32.mrb[0].mxu0
  %v286 = vadd.f32 0.0, %v285
  %v287 = vpop.f32.mrb[0].mxu0
  %288 = vmatprep.mubr.f32.mxu0 0.0
  %v289 = vand.u32 %v144, 4294901760
  %v290 = vsub.f32 %v144, %v289
  %v291 = vand.u32 %v290, 4294901760
  %v292 = vsub.f32 %v290, %v291
  %v293 = vand.u32 %v292, 4294901760
  %294 = vmatmul.mubr.f32.gmra.mrb[0].mxu0 %v293
  %v295 = vpop.f32.mrb[0].mxu0
  %v296 = vadd.f32 0.0, %v295
  %v297 = vpop.f32.mrb[0].mxu0
  %298 = vmatprep.mubr.f32.mxu0 0.0
  %v299 = vand.u32 %v147, 4294901760
  %v300 = vsub.f32 %v147, %v299
  %v301 = vand.u32 %v300, 4294901760
  %v302 = vsub.f32 %v300, %v301
  %v303 = vand.u32 %v302, 4294901760
  %304 = vmatmul.mubr.f32.gmra.mrb[0].mxu0 %v303
  %v305 = vpop.f32.mrb[0].mxu0
  %v306 = vadd.f32 0.0, %v305
  %v307 = vpop.f32.mrb[0].mxu0
  %308 = vmatprep.mubr.f32.mxu0 0.0
  %v309 = vand.u32 %v150, 4294901760
  %v310 = vsub.f32 %v150, %v309
  %v311 = vand.u32 %v310, 4294901760
  %v312 = vsub.f32 %v310, %v311
  %v313 = vand.u32 %v312, 4294901760
  %314 = vmatmul.mubr.f32.gmra.mrb[0].mxu0 %v313
  %v315 = vpop.f32.mrb[0].mxu0
  %v316 = vadd.f32 0.0, %v315
  %v317 = vpop.f32.mrb[0].mxu0
  %318 = vmatprep.mubr.f32.mxu0 0.0
  %v319 = vand.u32 %v153, 4294901760
  %v320 = vsub.f32 %v153, %v319
  %v321 = vand.u32 %v320, 4294901760
  %v322 = vsub.f32 %v320, %v321
  %v323 = vand.u32 %v322, 4294901760
  %324 = vmatmul.mubr.f32.gmra.mrb[0].mxu0 %v323
  %v325 = vpop.f32.mrb[0].mxu0
  %v326 = vadd.f32 0.0, %v325
  %v327 = vpop.f32.mrb[0].mxu0
  %328 = vmatprep.mubr.f32.mxu0 0.0
  %v329 = vand.u32 %v156, 4294901760
  %v330 = vsub.f32 %v156, %v329
  %v331 = vand.u32 %v330, 4294901760
  %v332 = vsub.f32 %v330, %v331
  %v333 = vand.u32 %v332, 4294901760
  %334 = vmatmul.mubr.f32.gmra.mrb[0].mxu0 %v333
  %v335 = vpop.f32.mrb[0].mxu0
  %v336 = vadd.f32 0.0, %v335
  %v337 = vpop.f32.mrb[0].mxu0
  %338 = vmatprep.mubr.f32.mxu0 0.0
  %v339 = vand.u32 %v159, 4294901760
  %v340 = vsub.f32 %v159, %v339
  %v341 = vand.u32 %v340, 4294901760
  %v342 = vsub.f32 %v340, %v341
  %v343 = vand.u32 %v342, 4294901760
  %344 = vmatmul.mubr.f32.gmra.mrb[0].mxu0 %v343
  %v345 = vpop.f32.mrb[0].mxu0
  %v346 = vadd.f32 0.0, %v345
  %v347 = vpop.f32.mrb[0].mxu0
  %348 = vmatprep.mubr.f32.mxu0 0.0
  %v349 = vand.u32 %v162, 4294901760
  %v350 = vsub.f32 %v162, %v349
  %v351 = vand.u32 %v350, 4294901760
  %v352 = vsub.f32 %v350, %v351
  %v353 = vand.u32 %v352, 4294901760
  %354 = vmatmul.mubr.f32.gmra.mrb[0].mxu0 %v353
  %v355 = vpop.f32.mrb[0].mxu0
  %v356 = vadd.f32 0.0, %v355
  %v357 = vpop.f32.mrb[0].mxu0
  %358 = vmatprep.mubr.f32.mxu0 0.0
  %v359 = vand.u32 %v165, 4294901760
  %v360 = vsub.f32 %v165, %v359
  %v361 = vand.u32 %v360, 4294901760
  %v362 = vsub.f32 %v360, %v361
  %v363 = vand.u32 %v362, 4294901760
  %364 = vmatmul.mubr.f32.gmra.mrb[0].mxu0 %v363
  %v365 = vpop.f32.mrb[0].mxu0
  %v366 = vadd.f32 0.0, %v365
  %v367 = vpop.f32.mrb[0].mxu0
  %368 = vmatprep.mubr.f32.mxu0 0.0
  %v369 = vand.u32 %v168, 4294901760
  %v370 = vsub.f32 %v168, %v369
  %v371 = vand.u32 %v370, 4294901760
  %v372 = vsub.f32 %v370, %v371
  %v373 = vand.u32 %v372, 4294901760
  %374 = vmatmul.mubr.f32.gmra.mrb[0].mxu0 %v373
  %v375 = vpop.f32.mrb[0].mxu0
  %v376 = vadd.f32 0.0, %v375
  %v377 = vpop.f32.mrb[0].mxu0
  %378 = vmatprep.mubr.f32.mxu0 0.0
  %v379 = vand.u32 %v171, 4294901760
  %v380 = vsub.f32 %v171, %v379
  %v381 = vand.u32 %v380, 4294901760
  %v382 = vsub.f32 %v380, %v381
  %v383 = vand.u32 %v382, 4294901760
  %384 = vmatmul.mubr.f32.gmra.mrb[0].mxu0 %v383
  %v385 = vpop.f32.mrb[0].mxu0
  %v386 = vadd.f32 0.0, %v385
  %v387 = vpop.f32.mrb[0].mxu0
  %388 = vmatprep.mubr.f32.mxu0 0.0
  %v389 = vand.u32 %v174, 4294901760
  %v390 = vsub.f32 %v174, %v389
  %v391 = vand.u32 %v390, 4294901760
  %v392 = vsub.f32 %v390, %v391
  %v393 = vand.u32 %v392, 4294901760
  %394 = vmatmul.mubr.f32.gmra.mrb[0].mxu0 %v393
  %v395 = vpop.f32.mrb[0].mxu0
  %v396 = vadd.f32 0.0, %v395
  %v397 = vpop.f32.mrb[0].mxu0
  %398 = vmatprep.mubr.f32.mxu0 0.0
  %v399 = vand.u32 %v177, 4294901760
  %v400 = vsub.f32 %v177, %v399
  %v401 = vand.u32 %v400, 4294901760
  %v402 = vsub.f32 %v400, %v401
  %v403 = vand.u32 %v402, 4294901760
  %404 = vmatmul.mubr.f32.gmra.mrb[0].mxu0 %v403
  %v405 = vpop.f32.mrb[0].mxu0
  %v406 = vadd.f32 0.0, %v405
  %v407 = vpop.f32.mrb[0].mxu0
  %408 = vmatprep.mubr.f32.mxu0 0.0
  %v409 = vand.u32 %v180, 4294901760
  %v410 = vsub.f32 %v180, %v409
  %v411 = vand.u32 %v410, 4294901760
  %v412 = vsub.f32 %v410, %v411
  %v413 = vand.u32 %v412, 4294901760
  %414 = vmatmul.mubr.f32.gmra.mrb[0].mxu0 %v413
  %v415 = vpop.f32.mrb[0].mxu0
  %v416 = vadd.f32 0.0, %v415
  %v417 = vpop.f32.mrb[0].mxu0
  %418 = vdwg.mxu0
  %419 = vmatprep.subr.mxu0 0.0
  %v420 = vand.u32 %v125, 4294901760
  %v421 = vsub.f32 %v125, %v420
  %v422 = vand.u32 %v421, 4294901760
  %v423 = vsub.f32 %v421, %v422
  %v424 = vand.u32 %v423, 4294901760
  %425 = vmatpush1.msra.mxu0 %v424
  %426 = vmatprep.subr.mxu0 0.0
  %v427 = vand.u32 %v126, 4294901760
  %v428 = vsub.f32 %v126, %v427
  %v429 = vand.u32 %v428, 4294901760
  %v430 = vsub.f32 %v428, %v429
  %v431 = vand.u32 %v430, 4294901760
  %432 = vmatpush1.msra.mxu0 %v431
  %433 = vmatprep.subr.mxu0 0.0
  %v434 = vand.u32 %v127, 4294901760
  %v435 = vsub.f32 %v127, %v434
  %v436 = vand.u32 %v435, 4294901760
  %v437 = vsub.f32 %v435, %v436
  %v438 = vand.u32 %v437, 4294901760
  %439 = vmatpush1.msra.mxu0 %v438
  %440 = vmatprep.subr.mxu0 0.0
  %v441 = vand.u32 %v128, 4294901760
  %v442 = vsub.f32 %v128, %v441
  %v443 = vand.u32 %v442, 4294901760
  %v444 = vsub.f32 %v442, %v443
  %v445 = vand.u32 %v444, 4294901760
  %446 = vmatpush1.msra.mxu0 %v445
  %447 = vmatprep.subr.mxu0 0.0
  %v448 = vand.u32 %v129, 4294901760
  %v449 = vsub.f32 %v129, %v448
  %v450 = vand.u32 %v449, 4294901760
  %v451 = vsub.f32 %v449, %v450
  %v452 = vand.u32 %v451, 4294901760
  %453 = vmatpush1.msra.mxu0 %v452
  %454 = vmatprep.subr.mxu0 0.0
  %v455 = vand.u32 %v130, 4294901760
  %v456 = vsub.f32 %v130, %v455
  %v457 = vand.u32 %v456, 4294901760
  %v458 = vsub.f32 %v456, %v457
  %v459 = vand.u32 %v458, 4294901760
  %460 = vmatpush1.msra.mxu0 %v459
  %461 = vmatprep.subr.mxu0 0.0
  %v462 = vand.u32 %v131, 4294901760
  %v463 = vsub.f32 %v131, %v462
  %v464 = vand.u32 %v463, 4294901760
  %v465 = vsub.f32 %v463, %v464
  %v466 = vand.u32 %v465, 4294901760
  %467 = vmatpush1.msra.mxu0 %v466
  %468 = vmatprep.subr.mxu0 0.0
  %v469 = vand.u32 %v184, 4294901760
  %v470 = vsub.f32 %v184, %v469
  %v471 = vand.u32 %v470, 4294901760
  %v472 = vsub.f32 %v470, %v471
  %v473 = vand.u32 %v472, 4294901760
  %474 = vmatpush1.msra.mxu0 %v473
  %475 = vmatprep.subr.mxu0 0.0
  %476 = vmatpush1.msra.mxu0 0.0
  %477 = vmatprep.subr.mxu0 0.0
  %478 = vmatpush1.msra.mxu0 0.0
  %479 = vmatprep.subr.mxu0 0.0
  %480 = vmatpush1.msra.mxu0 0.0
  %481 = vmatprep.subr.mxu0 0.0
  %482 = vmatpush1.msra.mxu0 0.0
  %483 = vmatprep.subr.mxu0 0.0
  %484 = vmatpush1.msra.mxu0 0.0
  %485 = vmatprep.subr.mxu0 0.0
  %486 = vmatpush1.msra.mxu0 0.0
  %487 = vmatprep.subr.mxu0 0.0
  %488 = vmatpush1.msra.mxu0 0.0
  %489 = vmatprep.subr.mxu0 0.0
  %490 = vmatpush1.msra.mxu0 0.0
  %491 = vmatprep.subr.mxu0 0.0
  %492 = vmatpush1.msra.mxu0 0.0
  %493 = vmatprep.subr.mxu0 0.0
  %494 = vmatpush1.msra.mxu0 0.0
  %495 = vmatprep.subr.mxu0 0.0
  %496 = vmatpush1.msra.mxu0 0.0
  %497 = vmatprep.subr.mxu0 0.0
  %498 = vmatpush1.msra.mxu0 0.0
  %499 = vmatprep.subr.mxu0 0.0
  %500 = vmatpush1.msra.mxu0 0.0
  %501 = vmatprep.subr.mxu0 0.0
  %502 = vmatpush1.msra.mxu0 0.0
  %503 = vmatprep.subr.mxu0 0.0
  %504 = vmatpush1.msra.mxu0 0.0
  %505 = vmatprep.subr.mxu0 0.0
  %506 = vmatpush1.msra.mxu0 0.0
  %507 = vmatprep.subr.mxu0 0.0
  %508 = vmatpush1.msra.mxu0 0.0
  %509 = vmatprep.subr.mxu0 0.0
  %510 = vmatpush1.msra.mxu0 0.0
  %511 = vmatprep.subr.mxu0 0.0
  %512 = vmatpush1.msra.mxu0 0.0
  %513 = vmatprep.subr.mxu0 0.0
  %514 = vmatpush1.msra.mxu0 0.0
  %515 = vmatprep.subr.mxu0 0.0
  %516 = vmatpush1.msra.mxu0 0.0
  %517 = vmatprep.subr.mxu0 0.0
  %518 = vmatpush1.msra.mxu0 0.0
  %519 = vmatprep.subr.mxu0 0.0
  %520 = vmatpush1.msra.mxu0 0.0
  %521 = vmatprep.subr.mxu0 0.0
  %522 = vmatpush1.msra.mxu0 0.0
  %523 = vmatprep.mubr.f32.mxu0 0.0
  %v524 = vand.u32 %v135, 4294901760
  %525 = vmatmul.mubr.f32.gmra.mrb[0].mxu0 %v524
  %v526 = vpop.f32.mrb[0].mxu0
  %v527 = vadd.f32 %v266, %v526
  %v528 = vpop.f32.mrb[0].mxu0
  %529 = vmatprep.mubr.f32.mxu0 0.0
  %v530 = vand.u32 %v138, 4294901760
  %531 = vmatmul.mubr.f32.gmra.mrb[0].mxu0 %v530
  %v532 = vpop.f32.mrb[0].mxu0
  %v533 = vadd.f32 %v276, %v532
  %v534 = vpop.f32.mrb[0].mxu0
  %535 = vmatprep.mubr.f32.mxu0 0.0
  %v536 = vand.u32 %v141, 4294901760
  %537 = vmatmul.mubr.f32.gmra.mrb[0].mxu0 %v536
  %v538 = vpop.f32.mrb[0].mxu0
  %v539 = vadd.f32 %v286, %v538
  %v540 = vpop.f32.mrb[0].mxu0
  %541 = vmatprep.mubr.f32.mxu0 0.0
  %v542 = vand.u32 %v144, 4294901760
  %543 = vmatmul.mubr.f32.gmra.mrb[0].mxu0 %v542
  %v544 = vpop.f32.mrb[0].mxu0
  %v545 = vadd.f32 %v296, %v544
  %v546 = vpop.f32.mrb[0].mxu0
  %547 = vmatprep.mubr.f32.mxu0 0.0
  %v548 = vand.u32 %v147, 4294901760
  %549 = vmatmul.mubr.f32.gmra.mrb[0].mxu0 %v548
  %v550 = vpop.f32.mrb[0].mxu0
  %v551 = vadd.f32 %v306, %v550
  %v552 = vpop.f32.mrb[0].mxu0
  %553 = vmatprep.mubr.f32.mxu0 0.0
  %v554 = vand.u32 %v150, 4294901760
  %555 = vmatmul.mubr.f32.gmra.mrb[0].mxu0 %v554
  %v556 = vpop.f32.mrb[0].mxu0
  %v557 = vadd.f32 %v316, %v556
  %v558 = vpop.f32.mrb[0].mxu0
  %559 = vmatprep.mubr.f32.mxu0 0.0
  %v560 = vand.u32 %v153, 4294901760
  %561 = vmatmul.mubr.f32.gmra.mrb[0].mxu0 %v560
  %v562 = vpop.f32.mrb[0].mxu0
  %v563 = vadd.f32 %v326, %v562
  %v564 = vpop.f32.mrb[0].mxu0
  %565 = vmatprep.mubr.f32.mxu0 0.0
  %v566 = vand.u32 %v156, 4294901760
  %567 = vmatmul.mubr.f32.gmra.mrb[0].mxu0 %v566
  %v568 = vpop.f32.mrb[0].mxu0
  %v569 = vadd.f32 %v336, %v568
  %v570 = vpop.f32.mrb[0].mxu0
  %571 = vmatprep.mubr.f32.mxu0 0.0
  %v572 = vand.u32 %v159, 4294901760
  %573 = vmatmul.mubr.f32.gmra.mrb[0].mxu0 %v572
  %v574 = vpop.f32.mrb[0].mxu0
  %v575 = vadd.f32 %v346, %v574
  %v576 = vpop.f32.mrb[0].mxu0
  %577 = vmatprep.mubr.f32.mxu0 0.0
  %v578 = vand.u32 %v162, 4294901760
  %579 = vmatmul.mubr.f32.gmra.mrb[0].mxu0 %v578
  %v580 = vpop.f32.mrb[0].mxu0
  %v581 = vadd.f32 %v356, %v580
  %v582 = vpop.f32.mrb[0].mxu0
  %583 = vmatprep.mubr.f32.mxu0 0.0
  %v584 = vand.u32 %v165, 4294901760
  %585 = vmatmul.mubr.f32.gmra.mrb[0].mxu0 %v584
  %v586 = vpop.f32.mrb[0].mxu0
  %v587 = vadd.f32 %v366, %v586
  %v588 = vpop.f32.mrb[0].mxu0
  %589 = vmatprep.mubr.f32.mxu0 0.0
  %v590 = vand.u32 %v168, 4294901760
  %591 = vmatmul.mubr.f32.gmra.mrb[0].mxu0 %v590
  %v592 = vpop.f32.mrb[0].mxu0
  %v593 = vadd.f32 %v376, %v592
  %v594 = vpop.f32.mrb[0].mxu0
  %595 = vmatprep.mubr.f32.mxu0 0.0
  %v596 = vand.u32 %v171, 4294901760
  %597 = vmatmul.mubr.f32.gmra.mrb[0].mxu0 %v596
  %v598 = vpop.f32.mrb[0].mxu0
  %v599 = vadd.f32 %v386, %v598
  %v600 = vpop.f32.mrb[0].mxu0
  %601 = vmatprep.mubr.f32.mxu0 0.0
  %v602 = vand.u32 %v174, 4294901760
  %603 = vmatmul.mubr.f32.gmra.mrb[0].mxu0 %v602
  %v604 = vpop.f32.mrb[0].mxu0
  %v605 = vadd.f32 %v396, %v604
  %v606 = vpop.f32.mrb[0].mxu0
  %607 = vmatprep.mubr.f32.mxu0 0.0
  %v608 = vand.u32 %v177, 4294901760
  %609 = vmatmul.mubr.f32.gmra.mrb[0].mxu0 %v608
  %v610 = vpop.f32.mrb[0].mxu0
  %v611 = vadd.f32 %v406, %v610
  %v612 = vpop.f32.mrb[0].mxu0
  %613 = vmatprep.mubr.f32.mxu0 0.0
  %v614 = vand.u32 %v180, 4294901760
  %615 = vmatmul.mubr.f32.gmra.mrb[0].mxu0 %v614
  %v616 = vpop.f32.mrb[0].mxu0
  %v617 = vadd.f32 %v416, %v616
  %v618 = vpop.f32.mrb[0].mxu0
  %619 = vdwg.mxu0
  %620 = vmatprep.subr.mxu0 0.0
  %v621 = vand.u32 %v125, 4294901760
  %v622 = vsub.f32 %v125, %v621
  %623 = vmatpush1.msra.mxu0 %v622
  %624 = vmatprep.subr.mxu0 0.0
  %v625 = vand.u32 %v126, 4294901760
  %v626 = vsub.f32 %v126, %v625
  %627 = vmatpush1.msra.mxu0 %v626
  %628 = vmatprep.subr.mxu0 0.0
  %v629 = vand.u32 %v127, 4294901760
  %v630 = vsub.f32 %v127, %v629
  %631 = vmatpush1.msra.mxu0 %v630
  %632 = vmatprep.subr.mxu0 0.0
  %v633 = vand.u32 %v128, 4294901760
  %v634 = vsub.f32 %v128, %v633
  %635 = vmatpush1.msra.mxu0 %v634
  %636 = vmatprep.subr.mxu0 0.0
  %v637 = vand.u32 %v129, 4294901760
  %v638 = vsub.f32 %v129, %v637
  %639 = vmatpush1.msra.mxu0 %v638
  %640 = vmatprep.subr.mxu0 0.0
  %v641 = vand.u32 %v130, 4294901760
  %v642 = vsub.f32 %v130, %v641
  %643 = vmatpush1.msra.mxu0 %v642
  %644 = vmatprep.subr.mxu0 0.0
  %v645 = vand.u32 %v131, 4294901760
  %v646 = vsub.f32 %v131, %v645
  %647 = vmatpush1.msra.mxu0 %v646
  %648 = vmatprep.subr.mxu0 0.0
  %v649 = vand.u32 %v184, 4294901760
  %v650 = vsub.f32 %v184, %v649
  %651 = vmatpush1.msra.mxu0 %v650
  %652 = vmatprep.subr.mxu0 0.0
  %653 = vmatpush1.msra.mxu0 0.0
  %654 = vmatprep.subr.mxu0 0.0
  %655 = vmatpush1.msra.mxu0 0.0
  %656 = vmatprep.subr.mxu0 0.0
  %657 = vmatpush1.msra.mxu0 0.0
  %658 = vmatprep.subr.mxu0 0.0
  %659 = vmatpush1.msra.mxu0 0.0
  %660 = vmatprep.subr.mxu0 0.0
  %661 = vmatpush1.msra.mxu0 0.0
  %662 = vmatprep.subr.mxu0 0.0
  %663 = vmatpush1.msra.mxu0 0.0
  %664 = vmatprep.subr.mxu0 0.0
  %665 = vmatpush1.msra.mxu0 0.0
  %666 = vmatprep.subr.mxu0 0.0
  %667 = vmatpush1.msra.mxu0 0.0
  %668 = vmatprep.subr.mxu0 0.0
  %669 = vmatpush1.msra.mxu0 0.0
  %670 = vmatprep.subr.mxu0 0.0
  %671 = vmatpush1.msra.mxu0 0.0
  %672 = vmatprep.subr.mxu0 0.0
  %673 = vmatpush1.msra.mxu0 0.0
  %674 = vmatprep.subr.mxu0 0.0
  %675 = vmatpush1.msra.mxu0 0.0
  %676 = vmatprep.subr.mxu0 0.0
  %677 = vmatpush1.msra.mxu0 0.0
  %678 = vmatprep.subr.mxu0 0.0
  %679 = vmatpush1.msra.mxu0 0.0
  %680 = vmatprep.subr.mxu0 0.0
  %681 = vmatpush1.msra.mxu0 0.0
  %682 = vmatprep.subr.mxu0 0.0
  %683 = vmatpush1.msra.mxu0 0.0
  %684 = vmatprep.subr.mxu0 0.0
  %685 = vmatpush1.msra.mxu0 0.0
  %686 = vmatprep.subr.mxu0 0.0
  %687 = vmatpush1.msra.mxu0 0.0
  %688 = vmatprep.subr.mxu0 0.0
  %689 = vmatpush1.msra.mxu0 0.0
  %690 = vmatprep.subr.mxu0 0.0
  %691 = vmatpush1.msra.mxu0 0.0
  %692 = vmatprep.subr.mxu0 0.0
  %693 = vmatpush1.msra.mxu0 0.0
  %694 = vmatprep.subr.mxu0 0.0
  %695 = vmatpush1.msra.mxu0 0.0
  %696 = vmatprep.subr.mxu0 0.0
  %697 = vmatpush1.msra.mxu0 0.0
  %698 = vmatprep.subr.mxu0 0.0
  %699 = vmatpush1.msra.mxu0 0.0
  %700 = vmatprep.mubr.f32.mxu0 0.0
  %v701 = vand.u32 %v135, 4294901760
  %v702 = vsub.f32 %v135, %v701
  %703 = vmatmul.mubr.f32.gmra.mrb[0].mxu0 %v702
  %v704 = vpop.f32.mrb[0].mxu0
  %v705 = vadd.f32 %v527, %v704
  %v706 = vpop.f32.mrb[0].mxu0
  %707 = vmatprep.mubr.f32.mxu0 0.0
  %v708 = vand.u32 %v138, 4294901760
  %v709 = vsub.f32 %v138, %v708
  %710 = vmatmul.mubr.f32.gmra.mrb[0].mxu0 %v709
  %v711 = vpop.f32.mrb[0].mxu0
  %v712 = vadd.f32 %v533, %v711
  %v713 = vpop.f32.mrb[0].mxu0
  %714 = vmatprep.mubr.f32.mxu0 0.0
  %v715 = vand.u32 %v141, 4294901760
  %v716 = vsub.f32 %v141, %v715
  %717 = vmatmul.mubr.f32.gmra.mrb[0].mxu0 %v716
  %v718 = vpop.f32.mrb[0].mxu0
  %v719 = vadd.f32 %v539, %v718
  %v720 = vpop.f32.mrb[0].mxu0
  %721 = vmatprep.mubr.f32.mxu0 0.0
  %v722 = vand.u32 %v144, 4294901760
  %v723 = vsub.f32 %v144, %v722
  %724 = vmatmul.mubr.f32.gmra.mrb[0].mxu0 %v723
  %v725 = vpop.f32.mrb[0].mxu0
  %v726 = vadd.f32 %v545, %v725
  %v727 = vpop.f32.mrb[0].mxu0
  %728 = vmatprep.mubr.f32.mxu0 0.0
  %v729 = vand.u32 %v147, 4294901760
  %v730 = vsub.f32 %v147, %v729
  %731 = vmatmul.mubr.f32.gmra.mrb[0].mxu0 %v730
  %v732 = vpop.f32.mrb[0].mxu0
  %v733 = vadd.f32 %v551, %v732
  %v734 = vpop.f32.mrb[0].mxu0
  %735 = vmatprep.mubr.f32.mxu0 0.0
  %v736 = vand.u32 %v150, 4294901760
  %v737 = vsub.f32 %v150, %v736
  %738 = vmatmul.mubr.f32.gmra.mrb[0].mxu0 %v737
  %v739 = vpop.f32.mrb[0].mxu0
  %v740 = vadd.f32 %v557, %v739
  %v741 = vpop.f32.mrb[0].mxu0
  %742 = vmatprep.mubr.f32.mxu0 0.0
  %v743 = vand.u32 %v153, 4294901760
  %v744 = vsub.f32 %v153, %v743
  %745 = vmatmul.mubr.f32.gmra.mrb[0].mxu0 %v744
  %v746 = vpop.f32.mrb[0].mxu0
  %v747 = vadd.f32 %v563, %v746
  %v748 = vpop.f32.mrb[0].mxu0
  %749 = vmatprep.mubr.f32.mxu0 0.0
  %v750 = vand.u32 %v156, 4294901760
  %v751 = vsub.f32 %v156, %v750
  %752 = vmatmul.mubr.f32.gmra.mrb[0].mxu0 %v751
  %v753 = vpop.f32.mrb[0].mxu0
  %v754 = vadd.f32 %v569, %v753
  %v755 = vpop.f32.mrb[0].mxu0
  %756 = vmatprep.mubr.f32.mxu0 0.0
  %v757 = vand.u32 %v159, 4294901760
  %v758 = vsub.f32 %v159, %v757
  %759 = vmatmul.mubr.f32.gmra.mrb[0].mxu0 %v758
  %v760 = vpop.f32.mrb[0].mxu0
  %v761 = vadd.f32 %v575, %v760
  %v762 = vpop.f32.mrb[0].mxu0
  %763 = vmatprep.mubr.f32.mxu0 0.0
  %v764 = vand.u32 %v162, 4294901760
  %v765 = vsub.f32 %v162, %v764
  %766 = vmatmul.mubr.f32.gmra.mrb[0].mxu0 %v765
  %v767 = vpop.f32.mrb[0].mxu0
  %v768 = vadd.f32 %v581, %v767
  %v769 = vpop.f32.mrb[0].mxu0
  %770 = vmatprep.mubr.f32.mxu0 0.0
  %v771 = vand.u32 %v165, 4294901760
  %v772 = vsub.f32 %v165, %v771
  %773 = vmatmul.mubr.f32.gmra.mrb[0].mxu0 %v772
  %v774 = vpop.f32.mrb[0].mxu0
  %v775 = vadd.f32 %v587, %v774
  %v776 = vpop.f32.mrb[0].mxu0
  %777 = vmatprep.mubr.f32.mxu0 0.0
  %v778 = vand.u32 %v168, 4294901760
  %v779 = vsub.f32 %v168, %v778
  %780 = vmatmul.mubr.f32.gmra.mrb[0].mxu0 %v779
  %v781 = vpop.f32.mrb[0].mxu0
  %v782 = vadd.f32 %v593, %v781
  %v783 = vpop.f32.mrb[0].mxu0
  %784 = vmatprep.mubr.f32.mxu0 0.0
  %v785 = vand.u32 %v171, 4294901760
  %v786 = vsub.f32 %v171, %v785
  %787 = vmatmul.mubr.f32.gmra.mrb[0].mxu0 %v786
  %v788 = vpop.f32.mrb[0].mxu0
  %v789 = vadd.f32 %v599, %v788
  %v790 = vpop.f32.mrb[0].mxu0
  %791 = vmatprep.mubr.f32.mxu0 0.0
  %v792 = vand.u32 %v174, 4294901760
  %v793 = vsub.f32 %v174, %v792
  %794 = vmatmul.mubr.f32.gmra.mrb[0].mxu0 %v793
  %v795 = vpop.f32.mrb[0].mxu0
  %v796 = vadd.f32 %v605, %v795
  %v797 = vpop.f32.mrb[0].mxu0
  %798 = vmatprep.mubr.f32.mxu0 0.0
  %v799 = vand.u32 %v177, 4294901760
  %v800 = vsub.f32 %v177, %v799
  %801 = vmatmul.mubr.f32.gmra.mrb[0].mxu0 %v800
  %v802 = vpop.f32.mrb[0].mxu0
  %v803 = vadd.f32 %v611, %v802
  %v804 = vpop.f32.mrb[0].mxu0
  %805 = vmatprep.mubr.f32.mxu0 0.0
  %v806 = vand.u32 %v180, 4294901760
  %v807 = vsub.f32 %v180, %v806
  %808 = vmatmul.mubr.f32.gmra.mrb[0].mxu0 %v807
  %v809 = vpop.f32.mrb[0].mxu0
  %v810 = vadd.f32 %v617, %v809
  %v811 = vpop.f32.mrb[0].mxu0
  %812 = vdwg.mxu0
  %813 = vmatprep.subr.mxu0 0.0
  %v814 = vand.u32 %v125, 4294901760
  %815 = vmatpush1.msra.mxu0 %v814
  %816 = vmatprep.subr.mxu0 0.0
  %v817 = vand.u32 %v126, 4294901760
  %818 = vmatpush1.msra.mxu0 %v817
  %819 = vmatprep.subr.mxu0 0.0
  %v820 = vand.u32 %v127, 4294901760
  %821 = vmatpush1.msra.mxu0 %v820
  %822 = vmatprep.subr.mxu0 0.0
  %v823 = vand.u32 %v128, 4294901760
  %824 = vmatpush1.msra.mxu0 %v823
  %825 = vmatprep.subr.mxu0 0.0
  %v826 = vand.u32 %v129, 4294901760
  %827 = vmatpush1.msra.mxu0 %v826
  %828 = vmatprep.subr.mxu0 0.0
  %v829 = vand.u32 %v130, 4294901760
  %830 = vmatpush1.msra.mxu0 %v829
  %831 = vmatprep.subr.mxu0 0.0
  %v832 = vand.u32 %v131, 4294901760
  %833 = vmatpush1.msra.mxu0 %v832
  %834 = vmatprep.subr.mxu0 0.0
  %v835 = vand.u32 %v184, 4294901760
  %836 = vmatpush1.msra.mxu0 %v835
  %837 = vmatprep.subr.mxu0 0.0
  %838 = vmatpush1.msra.mxu0 0.0
  %839 = vmatprep.subr.mxu0 0.0
  %840 = vmatpush1.msra.mxu0 0.0
  %841 = vmatprep.subr.mxu0 0.0
  %842 = vmatpush1.msra.mxu0 0.0
  %843 = vmatprep.subr.mxu0 0.0
  %844 = vmatpush1.msra.mxu0 0.0
  %845 = vmatprep.subr.mxu0 0.0
  %846 = vmatpush1.msra.mxu0 0.0
  %847 = vmatprep.subr.mxu0 0.0
  %848 = vmatpush1.msra.mxu0 0.0
  %849 = vmatprep.subr.mxu0 0.0
  %850 = vmatpush1.msra.mxu0 0.0
  %851 = vmatprep.subr.mxu0 0.0
  %852 = vmatpush1.msra.mxu0 0.0
  %853 = vmatprep.subr.mxu0 0.0
  %854 = vmatpush1.msra.mxu0 0.0
  %855 = vmatprep.subr.mxu0 0.0
  %856 = vmatpush1.msra.mxu0 0.0
  %857 = vmatprep.subr.mxu0 0.0
  %858 = vmatpush1.msra.mxu0 0.0
  %859 = vmatprep.subr.mxu0 0.0
  %860 = vmatpush1.msra.mxu0 0.0
  %861 = vmatprep.subr.mxu0 0.0
  %862 = vmatpush1.msra.mxu0 0.0
  %863 = vmatprep.subr.mxu0 0.0
  %864 = vmatpush1.msra.mxu0 0.0
  %865 = vmatprep.subr.mxu0 0.0
  %866 = vmatpush1.msra.mxu0 0.0
  %867 = vmatprep.subr.mxu0 0.0
  %868 = vmatpush1.msra.mxu0 0.0
  %869 = vmatprep.subr.mxu0 0.0
  %870 = vmatpush1.msra.mxu0 0.0
  %871 = vmatprep.subr.mxu0 0.0
  %872 = vmatpush1.msra.mxu0 0.0
  %873 = vmatprep.subr.mxu0 0.0
  %874 = vmatpush1.msra.mxu0 0.0
  %875 = vmatprep.subr.mxu0 0.0
  %876 = vmatpush1.msra.mxu0 0.0
  %877 = vmatprep.subr.mxu0 0.0
  %878 = vmatpush1.msra.mxu0 0.0
  %879 = vmatprep.subr.mxu0 0.0
  %880 = vmatpush1.msra.mxu0 0.0
  %881 = vmatprep.subr.mxu0 0.0
  %882 = vmatpush1.msra.mxu0 0.0
  %883 = vmatprep.subr.mxu0 0.0
  %884 = vmatpush1.msra.mxu0 0.0
  %885 = vmatprep.mubr.f32.mxu0 0.0
  %v886 = vand.u32 %v135, 4294901760
  %v887 = vsub.f32 %v135, %v886
  %v888 = vand.u32 %v887, 4294901760
  %889 = vmatmul.mubr.f32.gmra.mrb[0].mxu0 %v888
  %v890 = vpop.f32.mrb[0].mxu0
  %v891 = vadd.f32 %v705, %v890
  %v892 = vpop.f32.mrb[0].mxu0
  %893 = vmatprep.mubr.f32.mxu0 0.0
  %v894 = vand.u32 %v138, 4294901760
  %v895 = vsub.f32 %v138, %v894
  %v896 = vand.u32 %v895, 4294901760
  %897 = vmatmul.mubr.f32.gmra.mrb[0].mxu0 %v896
  %v898 = vpop.f32.mrb[0].mxu0
  %v899 = vadd.f32 %v712, %v898
  %v900 = vpop.f32.mrb[0].mxu0
  %901 = vmatprep.mubr.f32.mxu0 0.0
  %v902 = vand.u32 %v141, 4294901760
  %v903 = vsub.f32 %v141, %v902
  %v904 = vand.u32 %v903, 4294901760
  %905 = vmatmul.mubr.f32.gmra.mrb[0].mxu0 %v904
  %v906 = vpop.f32.mrb[0].mxu0
  %v907 = vadd.f32 %v719, %v906
  %v908 = vpop.f32.mrb[0].mxu0
  %909 = vmatprep.mubr.f32.mxu0 0.0
  %v910 = vand.u32 %v144, 4294901760
  %v911 = vsub.f32 %v144, %v910
  %v912 = vand.u32 %v911, 4294901760
  %913 = vmatmul.mubr.f32.gmra.mrb[0].mxu0 %v912
  %v914 = vpop.f32.mrb[0].mxu0
  %v915 = vadd.f32 %v726, %v914
  %v916 = vpop.f32.mrb[0].mxu0
  %917 = vmatprep.mubr.f32.mxu0 0.0
  %v918 = vand.u32 %v147, 4294901760
  %v919 = vsub.f32 %v147, %v918
  %v920 = vand.u32 %v919, 4294901760
  %921 = vmatmul.mubr.f32.gmra.mrb[0].mxu0 %v920
  %v922 = vpop.f32.mrb[0].mxu0
  %v923 = vadd.f32 %v733, %v922
  %v924 = vpop.f32.mrb[0].mxu0
  %925 = vmatprep.mubr.f32.mxu0 0.0
  %v926 = vand.u32 %v150, 4294901760
  %v927 = vsub.f32 %v150, %v926
  %v928 = vand.u32 %v927, 4294901760
  %929 = vmatmul.mubr.f32.gmra.mrb[0].mxu0 %v928
  %v930 = vpop.f32.mrb[0].mxu0
  %v931 = vadd.f32 %v740, %v930
  %v932 = vpop.f32.mrb[0].mxu0
  %933 = vmatprep.mubr.f32.mxu0 0.0
  %v934 = vand.u32 %v153, 4294901760
  %v935 = vsub.f32 %v153, %v934
  %v936 = vand.u32 %v935, 4294901760
  %937 = vmatmul.mubr.f32.gmra.mrb[0].mxu0 %v936
  %v938 = vpop.f32.mrb[0].mxu0
  %v939 = vadd.f32 %v747, %v938
  %v940 = vpop.f32.mrb[0].mxu0
  %941 = vmatprep.mubr.f32.mxu0 0.0
  %v942 = vand.u32 %v156, 4294901760
  %v943 = vsub.f32 %v156, %v942
  %v944 = vand.u32 %v943, 4294901760
  %945 = vmatmul.mubr.f32.gmra.mrb[0].mxu0 %v944
  %v946 = vpop.f32.mrb[0].mxu0
  %v947 = vadd.f32 %v754, %v946
  %v948 = vpop.f32.mrb[0].mxu0
  %949 = vmatprep.mubr.f32.mxu0 0.0
  %v950 = vand.u32 %v159, 4294901760
  %v951 = vsub.f32 %v159, %v950
  %v952 = vand.u32 %v951, 4294901760
  %953 = vmatmul.mubr.f32.gmra.mrb[0].mxu0 %v952
  %v954 = vpop.f32.mrb[0].mxu0
  %v955 = vadd.f32 %v761, %v954
  %v956 = vpop.f32.mrb[0].mxu0
  %957 = vmatprep.mubr.f32.mxu0 0.0
  %v958 = vand.u32 %v162, 4294901760
  %v959 = vsub.f32 %v162, %v958
  %v960 = vand.u32 %v959, 4294901760
  %961 = vmatmul.mubr.f32.gmra.mrb[0].mxu0 %v960
  %v962 = vpop.f32.mrb[0].mxu0
  %v963 = vadd.f32 %v768, %v962
  %v964 = vpop.f32.mrb[0].mxu0
  %965 = vmatprep.mubr.f32.mxu0 0.0
  %v966 = vand.u32 %v165, 4294901760
  %v967 = vsub.f32 %v165, %v966
  %v968 = vand.u32 %v967, 4294901760
  %969 = vmatmul.mubr.f32.gmra.mrb[0].mxu0 %v968
  %v970 = vpop.f32.mrb[0].mxu0
  %v971 = vadd.f32 %v775, %v970
  %v972 = vpop.f32.mrb[0].mxu0
  %973 = vmatprep.mubr.f32.mxu0 0.0
  %v974 = vand.u32 %v168, 4294901760
  %v975 = vsub.f32 %v168, %v974
  %v976 = vand.u32 %v975, 4294901760
  %977 = vmatmul.mubr.f32.gmra.mrb[0].mxu0 %v976
  %v978 = vpop.f32.mrb[0].mxu0
  %v979 = vadd.f32 %v782, %v978
  %v980 = vpop.f32.mrb[0].mxu0
  %981 = vmatprep.mubr.f32.mxu0 0.0
  %v982 = vand.u32 %v171, 4294901760
  %v983 = vsub.f32 %v171, %v982
  %v984 = vand.u32 %v983, 4294901760
  %985 = vmatmul.mubr.f32.gmra.mrb[0].mxu0 %v984
  %v986 = vpop.f32.mrb[0].mxu0
  %v987 = vadd.f32 %v789, %v986
  %v988 = vpop.f32.mrb[0].mxu0
  %989 = vmatprep.mubr.f32.mxu0 0.0
  %v990 = vand.u32 %v174, 4294901760
  %v991 = vsub.f32 %v174, %v990
  %v992 = vand.u32 %v991, 4294901760
  %993 = vmatmul.mubr.f32.gmra.mrb[0].mxu0 %v992
  %v994 = vpop.f32.mrb[0].mxu0
  %v995 = vadd.f32 %v796, %v994
  %v996 = vpop.f32.mrb[0].mxu0
  %997 = vmatprep.mubr.f32.mxu0 0.0
  %v998 = vand.u32 %v177, 4294901760
  %v999 = vsub.f32 %v177, %v998
  %v1000 = vand.u32 %v999, 4294901760
  %1001 = vmatmul.mubr.f32.gmra.mrb[0].mxu0 %v1000
  %v1002 = vpop.f32.mrb[0].mxu0
  %v1003 = vadd.f32 %v803, %v1002
  %v1004 = vpop.f32.mrb[0].mxu0
  %1005 = vmatprep.mubr.f32.mxu0 0.0
  %v1006 = vand.u32 %v180, 4294901760
  %v1007 = vsub.f32 %v180, %v1006
  %v1008 = vand.u32 %v1007, 4294901760
  %1009 = vmatmul.mubr.f32.gmra.mrb[0].mxu0 %v1008
  %v1010 = vpop.f32.mrb[0].mxu0
  %v1011 = vadd.f32 %v810, %v1010
  %v1012 = vpop.f32.mrb[0].mxu0
  %1013 = vdwg.mxu0
  %1014 = vmatprep.subr.mxu0 0.0
  %v1015 = vand.u32 %v125, 4294901760
  %v1016 = vsub.f32 %v125, %v1015
  %v1017 = vand.u32 %v1016, 4294901760
  %1018 = vmatpush1.msra.mxu0 %v1017
  %1019 = vmatprep.subr.mxu0 0.0
  %v1020 = vand.u32 %v126, 4294901760
  %v1021 = vsub.f32 %v126, %v1020
  %v1022 = vand.u32 %v1021, 4294901760
  %1023 = vmatpush1.msra.mxu0 %v1022
  %1024 = vmatprep.subr.mxu0 0.0
  %v1025 = vand.u32 %v127, 4294901760
  %v1026 = vsub.f32 %v127, %v1025
  %v1027 = vand.u32 %v1026, 4294901760
  %1028 = vmatpush1.msra.mxu0 %v1027
  %1029 = vmatprep.subr.mxu0 0.0
  %v1030 = vand.u32 %v128, 4294901760
  %v1031 = vsub.f32 %v128, %v1030
  %v1032 = vand.u32 %v1031, 4294901760
  %1033 = vmatpush1.msra.mxu0 %v1032
  %1034 = vmatprep.subr.mxu0 0.0
  %v1035 = vand.u32 %v129, 4294901760
  %v1036 = vsub.f32 %v129, %v1035
  %v1037 = vand.u32 %v1036, 4294901760
  %1038 = vmatpush1.msra.mxu0 %v1037
  %1039 = vmatprep.subr.mxu0 0.0
  %v1040 = vand.u32 %v130, 4294901760
  %v1041 = vsub.f32 %v130, %v1040
  %v1042 = vand.u32 %v1041, 4294901760
  %1043 = vmatpush1.msra.mxu0 %v1042
  %1044 = vmatprep.subr.mxu0 0.0
  %v1045 = vand.u32 %v131, 4294901760
  %v1046 = vsub.f32 %v131, %v1045
  %v1047 = vand.u32 %v1046, 4294901760
  %1048 = vmatpush1.msra.mxu0 %v1047
  %1049 = vmatprep.subr.mxu0 0.0
  %v1050 = vand.u32 %v184, 4294901760
  %v1051 = vsub.f32 %v184, %v1050
  %v1052 = vand.u32 %v1051, 4294901760
  %1053 = vmatpush1.msra.mxu0 %v1052
  %1054 = vmatprep.subr.mxu0 0.0
  %1055 = vmatpush1.msra.mxu0 0.0
  %1056 = vmatprep.subr.mxu0 0.0
  %1057 = vmatpush1.msra.mxu0 0.0
  %1058 = vmatprep.subr.mxu0 0.0
  %1059 = vmatpush1.msra.mxu0 0.0
  %1060 = vmatprep.subr.mxu0 0.0
  %1061 = vmatpush1.msra.mxu0 0.0
  %1062 = vmatprep.subr.mxu0 0.0
  %1063 = vmatpush1.msra.mxu0 0.0
  %1064 = vmatprep.subr.mxu0 0.0
  %1065 = vmatpush1.msra.mxu0 0.0
  %1066 = vmatprep.subr.mxu0 0.0
  %1067 = vmatpush1.msra.mxu0 0.0
  %1068 = vmatprep.subr.mxu0 0.0
  %1069 = vmatpush1.msra.mxu0 0.0
  %1070 = vmatprep.subr.mxu0 0.0
  %1071 = vmatpush1.msra.mxu0 0.0
  %1072 = vmatprep.subr.mxu0 0.0
  %1073 = vmatpush1.msra.mxu0 0.0
  %1074 = vmatprep.subr.mxu0 0.0
  %1075 = vmatpush1.msra.mxu0 0.0
  %1076 = vmatprep.subr.mxu0 0.0
  %1077 = vmatpush1.msra.mxu0 0.0
  %1078 = vmatprep.subr.mxu0 0.0
  %1079 = vmatpush1.msra.mxu0 0.0
  %1080 = vmatprep.subr.mxu0 0.0
  %1081 = vmatpush1.msra.mxu0 0.0
  %1082 = vmatprep.subr.mxu0 0.0
  %1083 = vmatpush1.msra.mxu0 0.0
  %1084 = vmatprep.subr.mxu0 0.0
  %1085 = vmatpush1.msra.mxu0 0.0
  %1086 = vmatprep.subr.mxu0 0.0
  %1087 = vmatpush1.msra.mxu0 0.0
  %1088 = vmatprep.subr.mxu0 0.0
  %1089 = vmatpush1.msra.mxu0 0.0
  %1090 = vmatprep.subr.mxu0 0.0
  %1091 = vmatpush1.msra.mxu0 0.0
  %1092 = vmatprep.subr.mxu0 0.0
  %1093 = vmatpush1.msra.mxu0 0.0
  %1094 = vmatprep.subr.mxu0 0.0
  %1095 = vmatpush1.msra.mxu0 0.0
  %1096 = vmatprep.subr.mxu0 0.0
  %1097 = vmatpush1.msra.mxu0 0.0
  %1098 = vmatprep.subr.mxu0 0.0
  %1099 = vmatpush1.msra.mxu0 0.0
  %1100 = vmatprep.subr.mxu0 0.0
  %1101 = vmatpush1.msra.mxu0 0.0
  %1102 = vmatprep.mubr.f32.mxu0 0.0
  %v1103 = vand.u32 %v135, 4294901760
  %1104 = vmatmul.mubr.f32.gmra.mrb[0].mxu0 %v1103
  %v1105 = vpop.f32.mrb[0].mxu0
  %v1106 = vadd.f32 %v891, %v1105
  %v1107 = vpop.f32.mrb[0].mxu0
  %1108 = vmatprep.mubr.f32.mxu0 0.0
  %v1109 = vand.u32 %v138, 4294901760
  %1110 = vmatmul.mubr.f32.gmra.mrb[0].mxu0 %v1109
  %v1111 = vpop.f32.mrb[0].mxu0
  %v1112 = vadd.f32 %v899, %v1111
  %v1113 = vpop.f32.mrb[0].mxu0
  %1114 = vmatprep.mubr.f32.mxu0 0.0
  %v1115 = vand.u32 %v141, 4294901760
  %1116 = vmatmul.mubr.f32.gmra.mrb[0].mxu0 %v1115
  %v1117 = vpop.f32.mrb[0].mxu0
  %v1118 = vadd.f32 %v907, %v1117
  %v1119 = vpop.f32.mrb[0].mxu0
  %1120 = vmatprep.mubr.f32.mxu0 0.0
  %v1121 = vand.u32 %v144, 4294901760
  %1122 = vmatmul.mubr.f32.gmra.mrb[0].mxu0 %v1121
  %v1123 = vpop.f32.mrb[0].mxu0
  %v1124 = vadd.f32 %v915, %v1123
  %v1125 = vpop.f32.mrb[0].mxu0
  %1126 = vmatprep.mubr.f32.mxu0 0.0
  %v1127 = vand.u32 %v147, 4294901760
  %1128 = vmatmul.mubr.f32.gmra.mrb[0].mxu0 %v1127
  %v1129 = vpop.f32.mrb[0].mxu0
  %v1130 = vadd.f32 %v923, %v1129
  %v1131 = vpop.f32.mrb[0].mxu0
  %1132 = vmatprep.mubr.f32.mxu0 0.0
  %v1133 = vand.u32 %v150, 4294901760
  %1134 = vmatmul.mubr.f32.gmra.mrb[0].mxu0 %v1133
  %v1135 = vpop.f32.mrb[0].mxu0
  %v1136 = vadd.f32 %v931, %v1135
  %v1137 = vpop.f32.mrb[0].mxu0
  %1138 = vmatprep.mubr.f32.mxu0 0.0
  %v1139 = vand.u32 %v153, 4294901760
  %1140 = vmatmul.mubr.f32.gmra.mrb[0].mxu0 %v1139
  %v1141 = vpop.f32.mrb[0].mxu0
  %v1142 = vadd.f32 %v939, %v1141
  %v1143 = vpop.f32.mrb[0].mxu0
  %1144 = vmatprep.mubr.f32.mxu0 0.0
  %v1145 = vand.u32 %v156, 4294901760
  %1146 = vmatmul.mubr.f32.gmra.mrb[0].mxu0 %v1145
  %v1147 = vpop.f32.mrb[0].mxu0
  %v1148 = vadd.f32 %v947, %v1147
  %v1149 = vpop.f32.mrb[0].mxu0
  %1150 = vmatprep.mubr.f32.mxu0 0.0
  %v1151 = vand.u32 %v159, 4294901760
  %1152 = vmatmul.mubr.f32.gmra.mrb[0].mxu0 %v1151
  %v1153 = vpop.f32.mrb[0].mxu0
  %v1154 = vadd.f32 %v955, %v1153
  %v1155 = vpop.f32.mrb[0].mxu0
  %1156 = vmatprep.mubr.f32.mxu0 0.0
  %v1157 = vand.u32 %v162, 4294901760
  %1158 = vmatmul.mubr.f32.gmra.mrb[0].mxu0 %v1157
  %v1159 = vpop.f32.mrb[0].mxu0
  %v1160 = vadd.f32 %v963, %v1159
  %v1161 = vpop.f32.mrb[0].mxu0
  %1162 = vmatprep.mubr.f32.mxu0 0.0
  %v1163 = vand.u32 %v165, 4294901760
  %1164 = vmatmul.mubr.f32.gmra.mrb[0].mxu0 %v1163
  %v1165 = vpop.f32.mrb[0].mxu0
  %v1166 = vadd.f32 %v971, %v1165
  %v1167 = vpop.f32.mrb[0].mxu0
  %1168 = vmatprep.mubr.f32.mxu0 0.0
  %v1169 = vand.u32 %v168, 4294901760
  %1170 = vmatmul.mubr.f32.gmra.mrb[0].mxu0 %v1169
  %v1171 = vpop.f32.mrb[0].mxu0
  %v1172 = vadd.f32 %v979, %v1171
  %v1173 = vpop.f32.mrb[0].mxu0
  %1174 = vmatprep.mubr.f32.mxu0 0.0
  %v1175 = vand.u32 %v171, 4294901760
  %1176 = vmatmul.mubr.f32.gmra.mrb[0].mxu0 %v1175
  %v1177 = vpop.f32.mrb[0].mxu0
  %v1178 = vadd.f32 %v987, %v1177
  %v1179 = vpop.f32.mrb[0].mxu0
  %1180 = vmatprep.mubr.f32.mxu0 0.0
  %v1181 = vand.u32 %v174, 4294901760
  %1182 = vmatmul.mubr.f32.gmra.mrb[0].mxu0 %v1181
  %v1183 = vpop.f32.mrb[0].mxu0
  %v1184 = vadd.f32 %v995, %v1183
  %v1185 = vpop.f32.mrb[0].mxu0
  %1186 = vmatprep.mubr.f32.mxu0 0.0
  %v1187 = vand.u32 %v177, 4294901760
  %1188 = vmatmul.mubr.f32.gmra.mrb[0].mxu0 %v1187
  %v1189 = vpop.f32.mrb[0].mxu0
  %v1190 = vadd.f32 %v1003, %v1189
  %v1191 = vpop.f32.mrb[0].mxu0
  %1192 = vmatprep.mubr.f32.mxu0 0.0
  %v1193 = vand.u32 %v180, 4294901760
  %1194 = vmatmul.mubr.f32.gmra.mrb[0].mxu0 %v1193
  %v1195 = vpop.f32.mrb[0].mxu0
  %v1196 = vadd.f32 %v1011, %v1195
  %v1197 = vpop.f32.mrb[0].mxu0
  %1198 = vdwg.mxu0
  %1199 = vmatprep.subr.mxu0 0.0
  %v1200 = vand.u32 %v125, 4294901760
  %1201 = vmatpush1.msra.mxu0 %v1200
  %1202 = vmatprep.subr.mxu0 0.0
  %v1203 = vand.u32 %v126, 4294901760
  %1204 = vmatpush1.msra.mxu0 %v1203
  %1205 = vmatprep.subr.mxu0 0.0
  %v1206 = vand.u32 %v127, 4294901760
  %1207 = vmatpush1.msra.mxu0 %v1206
  %1208 = vmatprep.subr.mxu0 0.0
  %v1209 = vand.u32 %v128, 4294901760
  %1210 = vmatpush1.msra.mxu0 %v1209
  %1211 = vmatprep.subr.mxu0 0.0
  %v1212 = vand.u32 %v129, 4294901760
  %1213 = vmatpush1.msra.mxu0 %v1212
  %1214 = vmatprep.subr.mxu0 0.0
  %v1215 = vand.u32 %v130, 4294901760
  %1216 = vmatpush1.msra.mxu0 %v1215
  %1217 = vmatprep.subr.mxu0 0.0
  %v1218 = vand.u32 %v131, 4294901760
  %1219 = vmatpush1.msra.mxu0 %v1218
  %1220 = vmatprep.subr.mxu0 0.0
  %v1221 = vand.u32 %v184, 4294901760
  %1222 = vmatpush1.msra.mxu0 %v1221
  %1223 = vmatprep.subr.mxu0 0.0
  %1224 = vmatpush1.msra.mxu0 0.0
  %1225 = vmatprep.subr.mxu0 0.0
  %1226 = vmatpush1.msra.mxu0 0.0
  %1227 = vmatprep.subr.mxu0 0.0
  %1228 = vmatpush1.msra.mxu0 0.0
  %1229 = vmatprep.subr.mxu0 0.0
  %1230 = vmatpush1.msra.mxu0 0.0
  %1231 = vmatprep.subr.mxu0 0.0
  %1232 = vmatpush1.msra.mxu0 0.0
  %1233 = vmatprep.subr.mxu0 0.0
  %1234 = vmatpush1.msra.mxu0 0.0
  %1235 = vmatprep.subr.mxu0 0.0
  %1236 = vmatpush1.msra.mxu0 0.0
  %1237 = vmatprep.subr.mxu0 0.0
  %1238 = vmatpush1.msra.mxu0 0.0
  %1239 = vmatprep.subr.mxu0 0.0
  %1240 = vmatpush1.msra.mxu0 0.0
  %1241 = vmatprep.subr.mxu0 0.0
  %1242 = vmatpush1.msra.mxu0 0.0
  %1243 = vmatprep.subr.mxu0 0.0
  %1244 = vmatpush1.msra.mxu0 0.0
  %1245 = vmatprep.subr.mxu0 0.0
  %1246 = vmatpush1.msra.mxu0 0.0
  %1247 = vmatprep.subr.mxu0 0.0
  %1248 = vmatpush1.msra.mxu0 0.0
  %1249 = vmatprep.subr.mxu0 0.0
  %1250 = vmatpush1.msra.mxu0 0.0
  %1251 = vmatprep.subr.mxu0 0.0
  %1252 = vmatpush1.msra.mxu0 0.0
  %1253 = vmatprep.subr.mxu0 0.0
  %1254 = vmatpush1.msra.mxu0 0.0
  %1255 = vmatprep.subr.mxu0 0.0
  %1256 = vmatpush1.msra.mxu0 0.0
  %1257 = vmatprep.subr.mxu0 0.0
  %1258 = vmatpush1.msra.mxu0 0.0
  %1259 = vmatprep.subr.mxu0 0.0
  %1260 = vmatpush1.msra.mxu0 0.0
  %1261 = vmatprep.subr.mxu0 0.0
  %1262 = vmatpush1.msra.mxu0 0.0
  %1263 = vmatprep.subr.mxu0 0.0
  %1264 = vmatpush1.msra.mxu0 0.0
  %1265 = vmatprep.subr.mxu0 0.0
  %1266 = vmatpush1.msra.mxu0 0.0
  %1267 = vmatprep.subr.mxu0 0.0
  %1268 = vmatpush1.msra.mxu0 0.0
  %1269 = vmatprep.subr.mxu0 0.0
  %1270 = vmatpush1.msra.mxu0 0.0
  %1271 = vmatprep.mubr.f32.mxu0 0.0
  %v1272 = vand.u32 %v135, 4294901760
  %1273 = vmatmul.mubr.f32.gmra.mrb[0].mxu0 %v1272
  %v1274 = vpop.f32.mrb[0].mxu0
  %v1275 = vadd.f32 %v1106, %v1274
  %v1276 = vpop.f32.mrb[0].mxu0
  %1277 = vmatprep.mubr.f32.mxu0 0.0
  %v1278 = vand.u32 %v138, 4294901760
  %1279 = vmatmul.mubr.f32.gmra.mrb[0].mxu0 %v1278
  %v1280 = vpop.f32.mrb[0].mxu0
  %v1281 = vadd.f32 %v1112, %v1280
  %v1282 = vpop.f32.mrb[0].mxu0
  %1283 = vmatprep.mubr.f32.mxu0 0.0
  %v1284 = vand.u32 %v141, 4294901760
  %1285 = vmatmul.mubr.f32.gmra.mrb[0].mxu0 %v1284
  %v1286 = vpop.f32.mrb[0].mxu0
  %v1287 = vadd.f32 %v1118, %v1286
  %v1288 = vpop.f32.mrb[0].mxu0
  %1289 = vmatprep.mubr.f32.mxu0 0.0
  %v1290 = vand.u32 %v144, 4294901760
  %1291 = vmatmul.mubr.f32.gmra.mrb[0].mxu0 %v1290
  %v1292 = vpop.f32.mrb[0].mxu0
  %v1293 = vadd.f32 %v1124, %v1292
  %v1294 = vpop.f32.mrb[0].mxu0
  %1295 = vmatprep.mubr.f32.mxu0 0.0
  %v1296 = vand.u32 %v147, 4294901760
  %1297 = vmatmul.mubr.f32.gmra.mrb[0].mxu0 %v1296
  %v1298 = vpop.f32.mrb[0].mxu0
  %v1299 = vadd.f32 %v1130, %v1298
  %v1300 = vpop.f32.mrb[0].mxu0
  %1301 = vmatprep.mubr.f32.mxu0 0.0
  %v1302 = vand.u32 %v150, 4294901760
  %1303 = vmatmul.mubr.f32.gmra.mrb[0].mxu0 %v1302
  %v1304 = vpop.f32.mrb[0].mxu0
  %v1305 = vadd.f32 %v1136, %v1304
  %v1306 = vpop.f32.mrb[0].mxu0
  %1307 = vmatprep.mubr.f32.mxu0 0.0
  %v1308 = vand.u32 %v153, 4294901760
  %1309 = vmatmul.mubr.f32.gmra.mrb[0].mxu0 %v1308
  %v1310 = vpop.f32.mrb[0].mxu0
  %v1311 = vadd.f32 %v1142, %v1310
  %v1312 = vpop.f32.mrb[0].mxu0
  %1313 = vmatprep.mubr.f32.mxu0 0.0
  %v1314 = vand.u32 %v156, 4294901760
  %1315 = vmatmul.mubr.f32.gmra.mrb[0].mxu0 %v1314
  %v1316 = vpop.f32.mrb[0].mxu0
  %v1317 = vadd.f32 %v1148, %v1316
  %v1318 = vpop.f32.mrb[0].mxu0
  %1319 = vmatprep.mubr.f32.mxu0 0.0
  %v1320 = vand.u32 %v159, 4294901760
  %1321 = vmatmul.mubr.f32.gmra.mrb[0].mxu0 %v1320
  %v1322 = vpop.f32.mrb[0].mxu0
  %v1323 = vadd.f32 %v1154, %v1322
  %v1324 = vpop.f32.mrb[0].mxu0
  %1325 = vmatprep.mubr.f32.mxu0 0.0
  %v1326 = vand.u32 %v162, 4294901760
  %1327 = vmatmul.mubr.f32.gmra.mrb[0].mxu0 %v1326
  %v1328 = vpop.f32.mrb[0].mxu0
  %v1329 = vadd.f32 %v1160, %v1328
  %v1330 = vpop.f32.mrb[0].mxu0
  %1331 = vmatprep.mubr.f32.mxu0 0.0
  %v1332 = vand.u32 %v165, 4294901760
  %1333 = vmatmul.mubr.f32.gmra.mrb[0].mxu0 %v1332
  %v1334 = vpop.f32.mrb[0].mxu0
  %v1335 = vadd.f32 %v1166, %v1334
  %v1336 = vpop.f32.mrb[0].mxu0
  %1337 = vmatprep.mubr.f32.mxu0 0.0
  %v1338 = vand.u32 %v168, 4294901760
  %1339 = vmatmul.mubr.f32.gmra.mrb[0].mxu0 %v1338
  %v1340 = vpop.f32.mrb[0].mxu0
  %v1341 = vadd.f32 %v1172, %v1340
  %v1342 = vpop.f32.mrb[0].mxu0
  %1343 = vmatprep.mubr.f32.mxu0 0.0
  %v1344 = vand.u32 %v171, 4294901760
  %1345 = vmatmul.mubr.f32.gmra.mrb[0].mxu0 %v1344
  %v1346 = vpop.f32.mrb[0].mxu0
  %v1347 = vadd.f32 %v1178, %v1346
  %v1348 = vpop.f32.mrb[0].mxu0
  %1349 = vmatprep.mubr.f32.mxu0 0.0
  %v1350 = vand.u32 %v174, 4294901760
  %1351 = vmatmul.mubr.f32.gmra.mrb[0].mxu0 %v1350
  %v1352 = vpop.f32.mrb[0].mxu0
  %v1353 = vadd.f32 %v1184, %v1352
  %v1354 = vpop.f32.mrb[0].mxu0
  %1355 = vmatprep.mubr.f32.mxu0 0.0
  %v1356 = vand.u32 %v177, 4294901760
  %1357 = vmatmul.mubr.f32.gmra.mrb[0].mxu0 %v1356
  %v1358 = vpop.f32.mrb[0].mxu0
  %v1359 = vadd.f32 %v1190, %v1358
  %v1360 = vpop.f32.mrb[0].mxu0
  %1361 = vmatprep.mubr.f32.mxu0 0.0
  %v1362 = vand.u32 %v180, 4294901760
  %1363 = vmatmul.mubr.f32.gmra.mrb[0].mxu0 %v1362
  %v1364 = vpop.f32.mrb[0].mxu0
  %v1365 = vadd.f32 %v1196, %v1364
  %v1366 = vpop.f32.mrb[0].mxu0
  %1367 = vdwg.mxu0
  %1368 = vst [vmem:[%s2] sm:$0xff] %v1275
  %1369 = vst [vmem:[%s2 + $0x8] sm:$0xff] %v1281
  %1370 = vst [vmem:[%s2 + $0x10] sm:$0xff] %v1287
  %1371 = vst [vmem:[%s2 + $0x18] sm:$0xff] %v1293
  %1372 = vst [vmem:[%s2 + $0x20] sm:$0xff] %v1299
  %1373 = vst [vmem:[%s2 + $0x28] sm:$0xff] %v1305
  %1374 = vst [vmem:[%s2 + $0x30] sm:$0xff] %v1311
  %1375 = vst [vmem:[%s2 + $0x38] sm:$0xff] %v1317
  %1376 = vst [vmem:[%s2 + $0x40] sm:$0xff] %v1323
  %1377 = vst [vmem:[%s2 + $0x48] sm:$0xff] %v1329
  %1378 = vst [vmem:[%s2 + $0x50] sm:$0xff] %v1335
  %1379 = vst [vmem:[%s2 + $0x58] sm:$0xff] %v1341
  %1380 = vst [vmem:[%s2 + $0x60] sm:$0xff] %v1347
  %1381 = vst [vmem:[%s2 + $0x68] sm:$0xff] %v1353
  %1382 = vst [vmem:[%s2 + $0x70] sm:$0xff] %v1359
  %1383 = vst [vmem:[%s2 + $0x78] sm:$0xff] %v1365
  // Predicated region
  $region10: #{upgo_compute_actor_critic.1} parent=0 // pred_check
    _
  $region11: #{upgo_compute_actor_critic.1} parent=0 // pred_check_branch
    %1385 = sbr.rel (0) target = $region13
  $region12: #{upgo_compute_actor_critic.1} parent=0 // pred_region
    _
  $region13: #{upgo_compute_actor_critic.1} parent=0 // pred_fallthru
    _
  // Predicated region
  $region14: #{upgo_compute_actor_critic.1} parent=0 // pred_check
    _
  $region15: #{upgo_compute_actor_critic.1} parent=0 // pred_check_branch
    %1387 = sbr.rel (0) target = $region17
  $region16: #{upgo_compute_actor_critic.1} parent=0 // pred_region
    _
  $region17: #{upgo_compute_actor_critic.1} parent=0 // pred_fallthru
    _

</llo_original>
